<compile_context>
chip_gen: v6e
topology: v6e:2x2x1
jax: 0.10.0
libtpu: 0.0.40
codegen_flags: <defaults>
</compile_context>

<pallas_src>
import jax
import jax.numpy as jnp
from jax import lax
from jax.experimental import pallas as pl
from jax.experimental.pallas import tpu as pltpu

CHUNK = 512           # inner compute sub-tile (lanes); multiple of 128
TB_MAX = 128 * 1024   # max batch tile (lanes); double-buffered VMEM stays ~4 MiB


def winloss_kernel(x_ref, w1_ref, b1_ref, w2_ref, b2_ref, o_ref):
    # x_ref : (1, TB)   batch tile, batch on the lane axis
    # w1_ref: (16, 1)   fc1.weight (column)   b1_ref: (16, 1) fc1.bias
    # w2_ref: (3, 16)   fc2.weight            b2_ref: (3, 1)  fc2.bias
    # o_ref : (3, TB)   softmax probabilities, lane-dense
    w1 = w1_ref[...]
    b1 = b1_ref[...]
    w2 = w2_ref[...]
    b2 = b2_ref[...]

    tb = x_ref.shape[1]
    n_chunks = tb // CHUNK   # static

    def body(c, carry):
        start = pl.multiple_of(c * CHUNK, CHUNK)
        x = x_ref[:, pl.ds(start, CHUNK)]                          # (1, CHUNK)

        # fc1 + ReLU: K=1 contraction == outer product -> pure VPU broadcast.
        h = jnp.maximum(w1 * x + b1, 0.0)                          # (16, CHUNK)

        # fc2: tiny per-chunk matmul on the (otherwise idle) MXU.
        logits = jnp.dot(w2, h,
                         preferred_element_type=jnp.float32) + b2  # (3, CHUNK)

        # Softmax over the 3 classes: sublane max/sum on the XLU, exp on the
        # EUP, approx reciprocal + one Newton step (meets 1e-5 tolerance).
        m = jnp.max(logits, axis=0, keepdims=True)                 # (1, CHUNK)
        e = jnp.exp(logits - m)                                    # (3, CHUNK)
        s = jnp.sum(e, axis=0, keepdims=True)                      # (1, CHUNK)
        r = pl.reciprocal(s, approx=True)
        r = r * (2.0 - s * r)                                      # Newton refine

        o_ref[:, pl.ds(start, CHUNK)] = (e * r).astype(o_ref.dtype)
        return carry

    lax.fori_loop(0, n_chunks, body, 0, unroll=(n_chunks <= 8))


def _round_up(n, m):
    return (n + m - 1) // m * m


def winloss_predictor(x, w1, b1, w2, b2, *, tb_max=TB_MAX, class_major=False,
                      out_dtype=jnp.float32):
    """Forward pass of WinLossPredictor.

    Args:
      x:  (B, 1) input (PyTorch layout).
      w1: (16, 1) fc1.weight, b1: (16,) fc1.bias   (PyTorch layouts).
      w2: (3, 16) fc2.weight, b2: (3,)  fc2.bias.
      tb_max: cap on the batch tile in lanes; must be a multiple of CHUNK.
      class_major: return the (3, B) class-major slab directly, skipping the
        (3,B)->(B,3) transpose (fast path if the consumer allows it).
      out_dtype: probability dtype (bf16 halves output HBM traffic but breaks
        the 1e-5 reference tolerance -- only if the contract allows).
    Returns:
      (B, 3) probabilities (or (3, B) if class_major=True).
    """
    assert tb_max % CHUNK == 0
    B = x.shape[0]

    # Tile as large as possible (amortize per-step overhead), but cap at
    # ~ceil(B/2) so >=2 independent tiles exist for v7x megacore sharding.
    tb = max(CHUNK, min(tb_max, _round_up(pl.cdiv(B, 2), CHUNK)))
    n_tiles = pl.cdiv(B, tb)
    Bp = n_tiles * tb

    # Layout plumbing: batch onto the lane axis; pad only the tail (zeros ->
    # finite softmax rows that are sliced off below).
    x_t = x.reshape(1, B).astype(jnp.float32)
    if Bp != B:
        x_t = jnp.pad(x_t, ((0, 0), (0, Bp - B)))
    w1c = w1.reshape(16, 1).astype(jnp.float32)
    b1c = b1.reshape(16, 1).astype(jnp.float32)
    w2m = w2.reshape(3, 16).astype(jnp.float32)
    b2c = b2.reshape(3, 1).astype(jnp.float32)

    param_bytes = 4 * (16 + 16 + 48 + 3)
    cost = pl.CostEstimate(
        flops=170 * Bp,                          # ~170 flops per batch element
        transcendentals=3 * Bp,                  # 3 exps per element
        bytes_accessed=(4 + 3 * jnp.dtype(out_dtype).itemsize) * Bp + param_bytes,
    )

    out_t = pl.pallas_call(
        winloss_kernel,
        out_shape=jax.ShapeDtypeStruct((3, Bp), out_dtype),
        grid_spec=pltpu.PrefetchScalarGridSpec(
            num_scalar_prefetch=0,
            grid=(n_tiles,),
            in_specs=[
                pl.BlockSpec((1, tb), lambda i: (0, i)),   # x tile (lane-dense)
                pl.BlockSpec((16, 1), lambda i: (0, 0)),   # fc1.weight (resident)
                pl.BlockSpec((16, 1), lambda i: (0, 0)),   # fc1.bias   (resident)
                pl.BlockSpec((3, 16), lambda i: (0, 0)),   # fc2.weight (resident)
                pl.BlockSpec((3, 1), lambda i: (0, 0)),    # fc2.bias   (resident)
            ],
            out_specs=pl.BlockSpec((3, tb), lambda i: (0, i)),
        ),
        compiler_params=pltpu.CompilerParams(
            # Batch tiles are independent; v7x shards them across its 2 TCs.
            dimension_semantics=("parallel",),
            vmem_limit_bytes=32 * 1024 * 1024,
        ),
        cost_estimate=cost,
    )(x_t, w1c, b1c, w2m, b2c)

    probs_cm = out_t[:, :B]                 # (3, B) class-major, padding dropped
    if class_major:
        return probs_cm
    # TODO(synk): this (3,B)->(B,3) transpose adds ~24 B/elem of HBM at large B;
    # prefer class_major=True when the consumer can take class-major output.
    return probs_cm.T


def reference_forward(x, w1, b1, w2, b2):
    h = jnp.maximum(x @ w1.T + b1, 0.0)
    logits = h @ w2.T + b2
    return jax.nn.softmax(logits, axis=1)


if __name__ == "__main__":
    key = jax.random.PRNGKey(0)
    k_x, k_w1, k_b1, k_w2, k_b2 = jax.random.split(key, 5)

    # Small batch that still exercises multi-tile pipelining (tb=512 -> 2 tiles)
    # and the padded tail (1000 -> 1024).
    B = 1000
    x = jax.random.normal(k_x, (B, 1), dtype=jnp.float32)

    # PyTorch nn.Linear-style uniform init (torch weight layouts).
    bound1 = 1.0                                  # 1/sqrt(in_features=1)
    w1 = jax.random.uniform(k_w1, (16, 1), jnp.float32, -bound1, bound1)
    b1 = jax.random.uniform(k_b1, (16,), jnp.float32, -bound1, bound1)
    bound2 = 1.0 / jnp.sqrt(16.0)
    w2 = jax.random.uniform(k_w2, (3, 16), jnp.float32, -bound2, bound2)
    b2 = jax.random.uniform(k_b2, (3,), jnp.float32, -bound2, bound2)

    out = winloss_predictor(x, w1, b1, w2, b2)
    out = jax.block_until_ready(out)

    ref = reference_forward(x, w1, b1, w2, b2)
    assert out.shape == (B, 3)
    assert jnp.allclose(out, ref, atol=1e-5, rtol=1e-5), "mismatch vs reference"
    assert jnp.allclose(jnp.sum(out, axis=1), 1.0, atol=1e-5), "rows must sum to 1"

    # Class-major fast path (no wrapper transpose) must agree as well.
    out_cm = jax.block_until_ready(
        winloss_predictor(x, w1, b1, w2, b2, class_major=True))
    assert out_cm.shape == (3, B)
    assert jnp.allclose(out_cm.T, out, atol=1e-6)

    print("KERNEL_OK")
</pallas_src>

<mosaic_0001>
module attributes {stable_mosaic.version = 11 : i64} {
  func.func @winloss_kernel(%arg0: i32, %arg1: memref<1x512xf32, #tpu.memory_space<vmem>>, %arg2: memref<16x1xf32, #tpu.memory_space<vmem>>, %arg3: memref<16x1xf32, #tpu.memory_space<vmem>>, %arg4: memref<3x16xf32, #tpu.memory_space<vmem>>, %arg5: memref<3x1xf32, #tpu.memory_space<vmem>>, %arg6: memref<3x512xf32, #tpu.memory_space<vmem>>) attributes {dimension_semantics = [#tpu.dimension_semantics<parallel>], iteration_bounds = array<i64: 2>, scalar_prefetch = 0 : i64, scratch_operands = 0 : i64, tpu.core_type = #tpu.core_type<tc>, window_params = [{transform_indices = @transform_0, window_bounds = array<i64: 1, 512>}, {pipeline_mode = #tpu.pipeline_mode<synchronous>, transform_indices = @transform_1, window_bounds = array<i64: 16, 1>}, {pipeline_mode = #tpu.pipeline_mode<synchronous>, transform_indices = @transform_2, window_bounds = array<i64: 16, 1>}, {pipeline_mode = #tpu.pipeline_mode<synchronous>, transform_indices = @transform_3, window_bounds = array<i64: 3, 16>}, {pipeline_mode = #tpu.pipeline_mode<synchronous>, transform_indices = @transform_4, window_bounds = array<i64: 3, 1>}, {transform_indices = @transform_5, window_bounds = array<i64: 3, 512>}]} {
    %c0 = arith.constant 0 : index
    %c0_0 = arith.constant 0 : index
    %0 = vector.load %arg2[%c0, %c0_0] : memref<16x1xf32, #tpu.memory_space<vmem>>, vector<16x1xf32>
    %c0_1 = arith.constant 0 : index
    %c0_2 = arith.constant 0 : index
    %1 = vector.load %arg3[%c0_1, %c0_2] : memref<16x1xf32, #tpu.memory_space<vmem>>, vector<16x1xf32>
    %c0_3 = arith.constant 0 : index
    %c0_4 = arith.constant 0 : index
    %2 = vector.load %arg4[%c0_3, %c0_4] : memref<3x16xf32, #tpu.memory_space<vmem>>, vector<3x16xf32>
    %c0_5 = arith.constant 0 : index
    %c0_6 = arith.constant 0 : index
    %3 = vector.load %arg5[%c0_5, %c0_6] : memref<3x1xf32, #tpu.memory_space<vmem>>, vector<3x1xf32>
    %c0_i32 = arith.constant 0 : i32
    %c512_i32 = arith.constant 512 : i32
    %4 = arith.muli %c0_i32, %c512_i32 : i32
    %5 = tpu.assume_multiple %4, 512 : i32
    %c0_7 = arith.constant 0 : index
    %6 = arith.index_cast %5 : i32 to index
    %7 = vector.load %arg1[%c0_7, %6] : memref<1x512xf32, #tpu.memory_space<vmem>>, vector<1x512xf32>
    %8 = vector.broadcast %0 : vector<16x1xf32> to vector<16x512xf32>
    %9 = vector.broadcast %7 : vector<1x512xf32> to vector<16x512xf32>
    %10 = arith.mulf %8, %9 : vector<16x512xf32>
    %11 = vector.broadcast %1 : vector<16x1xf32> to vector<16x512xf32>
    %12 = arith.addf %10, %11 : vector<16x512xf32>
    %cst = arith.constant 0.000000e+00 : f32
    %13 = vector.broadcast %cst : f32 to vector<16x512xf32>
    %14 = arith.maximumf %12, %13 : vector<16x512xf32>
    %cst_8 = arith.constant dense<0.000000e+00> : vector<3x512xf32>
    %15 = tpu.matmul %2, %14, %cst_8 {dimension_numbers = #tpu.dot_dimension_numbers<[1], [0], [0], [1], [0, 0, 1, 1], [], []>} : vector<3x16xf32>, vector<16x512xf32>, vector<3x512xf32> -> vector<3x512xf32>
    %16 = vector.broadcast %3 : vector<3x1xf32> to vector<3x512xf32>
    %17 = arith.addf %15, %16 : vector<3x512xf32>
    %cst_9 = arith.constant dense<0xFF800000> : vector<512xf32>
    %18 = vector.multi_reduction <maximumf>, %17, %cst_9 [0] : vector<3x512xf32> to vector<512xf32>
    %19 = vector.shape_cast %18 : vector<512xf32> to vector<1x512xf32>
    %20 = vector.broadcast %19 : vector<1x512xf32> to vector<3x512xf32>
    %21 = arith.subf %17, %20 : vector<3x512xf32>
    %22 = math.exp %21 : vector<3x512xf32>
    %cst_10 = arith.constant dense<0.000000e+00> : vector<512xf32>
    %23 = vector.multi_reduction <add>, %22, %cst_10 [0] : vector<3x512xf32> to vector<512xf32>
    %24 = vector.shape_cast %23 : vector<512xf32> to vector<1x512xf32>
    %25 = tpu.reciprocal %24 {approx = true} : vector<1x512xf32> -> vector<1x512xf32>
    %26 = arith.mulf %24, %25 : vector<1x512xf32>
    %cst_11 = arith.constant 2.000000e+00 : f32
    %27 = vector.broadcast %cst_11 : f32 to vector<1x512xf32>
    %28 = arith.subf %27, %26 : vector<1x512xf32>
    %29 = arith.mulf %25, %28 : vector<1x512xf32>
    %30 = vector.broadcast %29 : vector<1x512xf32> to vector<3x512xf32>
    %31 = arith.mulf %22, %30 : vector<3x512xf32>
    %c0_12 = arith.constant 0 : index
    %32 = arith.index_cast %5 : i32 to index
    %33 = vector.load %arg6[%c0_12, %32] : memref<3x512xf32, #tpu.memory_space<vmem>>, vector<3x512xf32>
    tpu.vector_store %arg6[%c0_12, %32], %31 {strides = array<i32>} : memref<3x512xf32, #tpu.memory_space<vmem>>, vector<3x512xf32>,
    %c1_i32 = arith.constant 1 : i32
    return
  }
  func.func @transform_0(%arg0: i32) -> (i32, i32) {
    %c0_i32 = arith.constant 0 : i32
    %c0_i32_0 = arith.constant 0 : i32
    return %c0_i32, %arg0 : i32, i32
  }
  func.func @transform_1(%arg0: i32) -> (i32, i32) {
    %c0_i32 = arith.constant 0 : i32
    %c0_i32_0 = arith.constant 0 : i32
    %c0_i32_1 = arith.constant 0 : i32
    return %c0_i32, %c0_i32_0 : i32, i32
  }
  func.func @transform_2(%arg0: i32) -> (i32, i32) {
    %c0_i32 = arith.constant 0 : i32
    %c0_i32_0 = arith.constant 0 : i32
    %c0_i32_1 = arith.constant 0 : i32
    return %c0_i32, %c0_i32_0 : i32, i32
  }
  func.func @transform_3(%arg0: i32) -> (i32, i32) {
    %c0_i32 = arith.constant 0 : i32
    %c0_i32_0 = arith.constant 0 : i32
    %c0_i32_1 = arith.constant 0 : i32
    return %c0_i32, %c0_i32_0 : i32, i32
  }
  func.func @transform_4(%arg0: i32) -> (i32, i32) {
    %c0_i32 = arith.constant 0 : i32
    %c0_i32_0 = arith.constant 0 : i32
    %c0_i32_1 = arith.constant 0 : i32
    return %c0_i32, %c0_i32_0 : i32, i32
  }
  func.func @transform_5(%arg0: i32) -> (i32, i32) {
    %c0_i32 = arith.constant 0 : i32
    %c0_i32_0 = arith.constant 0 : i32
    return %c0_i32, %arg0 : i32, i32
  }
}

</mosaic_0001>

<llo_original>
// kernel: tpu_custom_call.1
$region0: #{tpu_custom_call.1}
  #allocation0 [shape = 'u32[]', space=smem, size = 0x4, offset = 0x4, fixed_abs, tag = 'smem constant byte address 0x4 - core index']
  #allocation1 [shape = 'u32[144,128]{1,0:T(1,128)}', space=vmem, size = 0x12000, scoped, tag = 'internal scratch']
  %s0 = inlined_call_operand.vmem [shape: f32[1,1024], index: 0, kind: input, shape index: {}]
  %s1 = inlined_call_operand.vmem [shape: f32[16,1], index: 1, kind: input, shape index: {}]
  %s2 = inlined_call_operand.vmem [shape: f32[16,1], index: 2, kind: input, shape index: {}]
  %s3 = inlined_call_operand.vmem [shape: f32[3,16], index: 3, kind: input, shape index: {}]
  %s4 = inlined_call_operand.vmem [shape: f32[3,1], index: 4, kind: input, shape index: {}]
  %s5 = inlined_call_operand.hbm [shape: f32[3,1024], index: 5, kind: output, shape index: {}]
  %s6 = sld [smem:[#allocation0]]
  $region53: #{tpu_custom_call.1} parent=0
    _
  %s8 = ssub.s32 1, %s6
  %s9 = scalar_select 0, %s8, %s6
  $region1: #{tpu_custom_call.1} parent=0
    #allocation2 [shape = 'u8[16384]{0}', space=vmem, size = 0x4000, scoped, tag = 'output window, operand 0']
    #allocation3 [shape = 's32[2]{0}', space=sflag, size = 0x8, scoped, tag = 'scoped memory for tpu_custom_call.1']
    %10 = vsyncpa [#allocation3], 0
    %s11 = scalar_lea.sflag [#allocation3], 1
    %12 = vsyncpa %s11, 0
    loop: start=0, step=1, limit=4
    $region2: #{tpu_custom_call.1} parent=1 // loop_pre_header
      _
    $region3: #{tpu_custom_call.1} parent=1 // loop_header
      %s14 = sphi 0, %s18
      %p15 = scmp.ge.s32.totalorder %s14, 4
      %s24 = sphi 0, %s26
      %s27 = sphi 0, %s24
      %s28 = sphi 0, %s27
      %s44 = sphi 0, %s28
      %s48 = sphi 0, %s48
      %s50 = sphi 0, %s48
      %s51 = sphi 0, %s50
      %s65 = sphi 0, %s51
      %s69 = sphi 0, %s69
      %s71 = sphi 0, %s69
      %s72 = sphi 0, %s71
      %s86 = sphi 0, %s72
      %s90 = sphi 0, %s90
      %s92 = sphi 0, %s90
      %s93 = sphi 0, %s92
      %s107 = sphi 0, %s93
      %s111 = sphi 0, %s111
      %s113 = sphi 0, %s111
      %s114 = sphi 0, %s113
      %s128 = sphi 0, %s114
      %s134 = sphi 0, %s136
      %s137 = sphi 0, %s134
      %s138 = sphi 0, %s137
      %s154 = sphi 0, %s138
    $region4: #{tpu_custom_call.1} parent=1 // loop_header_branch
      %17 = sbr.rel (%p15) target = $region8
    $region5: #{tpu_custom_call.1} parent=1 // loop_body
      %s19 = ssub.s32 %s14, 1
      %s20 = ssub.s32 %s14, 2
      %s21 = sadd.s32 %s14, 1
      %s22 = ssub.s32 %s14, %s21
      %p23 = scmp.eq.s32.totalorder %s22, 0
      %s25 = sadd.s32 %s24, 1
      %s26 = scalar_select %p23, %s24, %s25
      %p29 = pneg %p23
      %p30 = scmp.eq.s32.totalorder %s14, 1
      %p31 = por %p29, %p30
      %p32 = scmp.ne.s32.totalorder %s24, %s27
      %p33 = scmp.eq.s32.totalorder %s14, 0
      %p34 = por %p32, %p33
      %p35 = scmp.ne.s32.totalorder %s24, %s27
      %p36 = scmp.eq.s32.totalorder %s19, 1
      %p37 = por %p35, %p36
      %p38 = scmp.ne.s32.totalorder %s27, %s28
      %p39 = scmp.eq.s32.totalorder %s19, 0
      %p40 = por %p38, %p39
      %p41 = scmp.ne.s32.totalorder %s27, %s28
      %p42 = scmp.eq.s32.totalorder %s20, 1
      %p43 = por %p41, %p42
      %p45 = scmp.ne.s32.totalorder %s28, %s44
      %p46 = scmp.eq.s32.totalorder %s20, 0
      %p47 = por %p45, %p46
      %s49 = sadd.s32 %s48, 1
      %p52 = scmp.eq.s32.totalorder %s14, 1
      %p53 = scmp.ne.s32.totalorder %s48, %s50
      %p54 = scmp.eq.s32.totalorder %s14, 0
      %p55 = por %p53, %p54
      %p56 = scmp.ne.s32.totalorder %s48, %s50
      %p57 = scmp.eq.s32.totalorder %s19, 1
      %p58 = por %p56, %p57
      %p59 = scmp.ne.s32.totalorder %s50, %s51
      %p60 = scmp.eq.s32.totalorder %s19, 0
      %p61 = por %p59, %p60
      %p62 = scmp.ne.s32.totalorder %s50, %s51
      %p63 = scmp.eq.s32.totalorder %s20, 1
      %p64 = por %p62, %p63
      %p66 = scmp.ne.s32.totalorder %s51, %s65
      %p67 = scmp.eq.s32.totalorder %s20, 0
      %p68 = por %p66, %p67
      %s70 = sadd.s32 %s69, 1
      %p73 = scmp.eq.s32.totalorder %s14, 1
      %p74 = scmp.ne.s32.totalorder %s69, %s71
      %p75 = scmp.eq.s32.totalorder %s14, 0
      %p76 = por %p74, %p75
      %p77 = scmp.ne.s32.totalorder %s69, %s71
      %p78 = scmp.eq.s32.totalorder %s19, 1
      %p79 = por %p77, %p78
      %p80 = scmp.ne.s32.totalorder %s71, %s72
      %p81 = scmp.eq.s32.totalorder %s19, 0
      %p82 = por %p80, %p81
      %p83 = scmp.ne.s32.totalorder %s71, %s72
      %p84 = scmp.eq.s32.totalorder %s20, 1
      %p85 = por %p83, %p84
      %p87 = scmp.ne.s32.totalorder %s72, %s86
      %p88 = scmp.eq.s32.totalorder %s20, 0
      %p89 = por %p87, %p88
      %s91 = sadd.s32 %s90, 1
      %p94 = scmp.eq.s32.totalorder %s14, 1
      %p95 = scmp.ne.s32.totalorder %s90, %s92
      %p96 = scmp.eq.s32.totalorder %s14, 0
      %p97 = por %p95, %p96
      %p98 = scmp.ne.s32.totalorder %s90, %s92
      %p99 = scmp.eq.s32.totalorder %s19, 1
      %p100 = por %p98, %p99
      %p101 = scmp.ne.s32.totalorder %s92, %s93
      %p102 = scmp.eq.s32.totalorder %s19, 0
      %p103 = por %p101, %p102
      %p104 = scmp.ne.s32.totalorder %s92, %s93
      %p105 = scmp.eq.s32.totalorder %s20, 1
      %p106 = por %p104, %p105
      %p108 = scmp.ne.s32.totalorder %s93, %s107
      %p109 = scmp.eq.s32.totalorder %s20, 0
      %p110 = por %p108, %p109
      %s112 = sadd.s32 %s111, 1
      %p115 = scmp.eq.s32.totalorder %s14, 1
      %p116 = scmp.ne.s32.totalorder %s111, %s113
      %p117 = scmp.eq.s32.totalorder %s14, 0
      %p118 = por %p116, %p117
      %p119 = scmp.ne.s32.totalorder %s111, %s113
      %p120 = scmp.eq.s32.totalorder %s19, 1
      %p121 = por %p119, %p120
      %p122 = scmp.ne.s32.totalorder %s113, %s114
      %p123 = scmp.eq.s32.totalorder %s19, 0
      %p124 = por %p122, %p123
      %p125 = scmp.ne.s32.totalorder %s113, %s114
      %p126 = scmp.eq.s32.totalorder %s20, 1
      %p127 = por %p125, %p126
      %p129 = scmp.ne.s32.totalorder %s114, %s128
      %p130 = scmp.eq.s32.totalorder %s20, 0
      %p131 = por %p129, %p130
      %s132 = ssub.s32 %s14, %s21
      %p133 = scmp.eq.s32.totalorder %s132, 0
      %s135 = sadd.s32 %s134, 1
      %s136 = scalar_select %p133, %s134, %s135
      %p139 = pneg %p133
      %p140 = scmp.eq.s32.totalorder %s14, 1
      %p141 = por %p139, %p140
      %p142 = scmp.ne.s32.totalorder %s134, %s137
      %p143 = scmp.eq.s32.totalorder %s14, 0
      %p144 = por %p142, %p143
      %p145 = scmp.ne.s32.totalorder %s134, %s137
      %p146 = scmp.eq.s32.totalorder %s19, 1
      %p147 = por %p145, %p146
      %p148 = scmp.ne.s32.totalorder %s137, %s138
      %p149 = scmp.eq.s32.totalorder %s19, 0
      %p150 = por %p148, %p149
      %p151 = scmp.ne.s32.totalorder %s137, %s138
      %p152 = scmp.eq.s32.totalorder %s20, 1
      %p153 = por %p151, %p152
      %p155 = scmp.ne.s32.totalorder %s138, %s154
      %p156 = scmp.eq.s32.totalorder %s20, 0
      %p157 = por %p155, %p156
      %p158 = scmp.le.s32.totalorder 1, %s14
      %p159 = scmp.lt.s32.totalorder %s14, 3
      %p160 = pnand %p158, %p159
      %p161 = pneg %p160
      // Predicated region
      $region9: #{tpu_custom_call.1} parent=5 // pred_check
        _
      $region10: #{tpu_custom_call.1} parent=5 // pred_check_branch
        %163 = sbr.rel (%p160) target = $region12
      $region11: #{tpu_custom_call.1} parent=5 // pred_region
        %s164 = ssub.s32 %s14, 1
        // Predicated region
        $region13: #{tpu_custom_call.1} parent=11 // pred_check
          %p165 = pneg %p61
        $region14: #{tpu_custom_call.1} parent=11 // pred_check_branch
          %167 = sbr.rel (%p165) target = $region16
        $region15: #{tpu_custom_call.1} parent=11 // pred_region
          _
        $region16: #{tpu_custom_call.1} parent=11 // pred_fallthru
          _
        // Predicated region
        $region17: #{tpu_custom_call.1} parent=11 // pred_check
          %p168 = pneg %p82
        $region18: #{tpu_custom_call.1} parent=11 // pred_check_branch
          %170 = sbr.rel (%p168) target = $region20
        $region19: #{tpu_custom_call.1} parent=11 // pred_region
          _
        $region20: #{tpu_custom_call.1} parent=11 // pred_fallthru
          _
        // Predicated region
        $region21: #{tpu_custom_call.1} parent=11 // pred_check
          %p171 = pneg %p103
        $region22: #{tpu_custom_call.1} parent=11 // pred_check_branch
          %173 = sbr.rel (%p171) target = $region24
        $region23: #{tpu_custom_call.1} parent=11 // pred_region
          _
        $region24: #{tpu_custom_call.1} parent=11 // pred_fallthru
          _
        // Predicated region
        $region25: #{tpu_custom_call.1} parent=11 // pred_check
          %p174 = pneg %p124
        $region26: #{tpu_custom_call.1} parent=11 // pred_check_branch
          %176 = sbr.rel (%p174) target = $region28
        $region27: #{tpu_custom_call.1} parent=11 // pred_region
          _
        $region28: #{tpu_custom_call.1} parent=11 // pred_fallthru
          _
      $region12: #{tpu_custom_call.1} parent=5 // pred_fallthru
        _
      %p177 = scmp.lt.s32.totalorder %s14, 2
      // Predicated region
      $region29: #{tpu_custom_call.1} parent=5 // pred_check
        %p178 = pneg %p177
      $region30: #{tpu_custom_call.1} parent=5 // pred_check_branch
        %180 = sbr.rel (%p178) target = $region32
      $region31: #{tpu_custom_call.1} parent=5 // pred_region
        // Predicated region
        $region33: #{tpu_custom_call.1} parent=31 // pred_check
          %p181 = pneg %p34
        $region34: #{tpu_custom_call.1} parent=31 // pred_check_branch
          %183 = sbr.rel (%p181) target = $region36
        $region35: #{tpu_custom_call.1} parent=31 // pred_region
          %s184 = smul.u32 4, %s14
          %p185 = scmp.lt.s32.totalorder %s184, 7
          %s186 = scalar_select %p185, %s184, 7
          %s187 = scalar_lea.vmem %s0, %s186
          %s188 = smul.u32 4, %s14
        $region36: #{tpu_custom_call.1} parent=31 // pred_fallthru
          _
      $region32: #{tpu_custom_call.1} parent=5 // pred_fallthru
        _
      %p189 = scmp.le.s32.totalorder 1, %s14
      %p190 = scmp.lt.s32.totalorder %s14, 3
      %p191 = pnand %p189, %p190
      %p192 = pneg %p191
      // Predicated region
      $region37: #{tpu_custom_call.1} parent=5 // pred_check
        _
      $region38: #{tpu_custom_call.1} parent=5 // pred_check_branch
        %194 = sbr.rel (%p191) target = $region40
      $region39: #{tpu_custom_call.1} parent=5 // pred_region
        %s195 = ssub.s32 %s14, 1
        %s196 = smul.u32 4, %s19
        %p197 = scmp.lt.s32.totalorder %s196, 7
        %s198 = scalar_select %p197, %s196, 7
        %s199 = scalar_lea.vmem %s0, %s198
        %p200 = pneg %p40
        %p201 = pneg %p37
        %p202 = pneg %p61
        %p203 = pneg %p58
        %p204 = pneg %p82
        %p205 = pneg %p79
        %p206 = pneg %p103
        %p207 = pneg %p100
        %p208 = pneg %p124
        %p209 = pneg %p121
        %p210 = pneg %p150
        %p211 = pneg %p147
        %s212 = sand.u32 %s137, 1
        %s213 = scalar_lea.sflag [#allocation3], %s212
        %s214 = sand.u32 %s137, 1
        %s215 = smul.addr %s214, 16
        %s216 = scalar_lea.vmem [#allocation2], %s215
        %s217 = smul.u32 4, %s19
        %p218 = scmp.lt.s32.totalorder %s217, 7
        %s219 = scalar_select %p218, %s217, 7
        %s220 = scalar_lea.vmem %s0, %s219
        %s221 = smul.u32 4, %s19
        %s222 = smul.u32 4, %s19
        %v223 = vld [vmem:[%s1] sm:$0xff]
        %v224 = vld [vmem:[%s1 + $0x8] sm:$0xff]
        %v225 = vld [vmem:[%s2] sm:$0xff]
        %v226 = vld [vmem:[%s2 + $0x8] sm:$0xff]
        %v227 = vld [vmem:[%s3] sm:$0x7]
        %v228 = vld [vmem:[%s4] sm:$0x7]
        %v229 = vld [vmem:[%s220] sm:$0xf]
        %231 = vset.pattern.permute.xlu0 0
        %232 = vperm.xlu0 %231, %v223
        %v233 = vpop.permute.xlu0 %232
        %236 = vset.pattern.permute.xlu0 0
        %237 = vperm.xlu0 %236, %v224
        %v238 = vpop.permute.xlu0 %237
        %v241 = vlaneseq
        %v242 = vshrl.u32 %v241, 7
        %v243 = vsub.s32 0, %v242
        %v244 = vrot.slane %v229, %v243
        %v245 = vlaneseq
        %v246 = vshrl.u32 %v245, 7
        %v247 = vsub.s32 1, %v246
        %v248 = vrot.slane %v229, %v247
        %v249 = vlaneseq
        %v250 = vshrl.u32 %v249, 7
        %v251 = vsub.s32 2, %v250
        %v252 = vrot.slane %v229, %v251
        %v253 = vlaneseq
        %v254 = vshrl.u32 %v253, 7
        %v255 = vsub.s32 3, %v254
        %v256 = vrot.slane %v229, %v255
        %v261 = vmul.f32 %v233, %v244
        %v262 = vmul.f32 %v233, %v248
        %v263 = vmul.f32 %v233, %v252
        %v264 = vmul.f32 %v233, %v256
        %v265 = vmul.f32 %v238, %v244
        %v266 = vmul.f32 %v238, %v248
        %v267 = vmul.f32 %v238, %v252
        %v268 = vmul.f32 %v238, %v256
        %270 = vset.pattern.permute.xlu0 0
        %271 = vperm.xlu0 %270, %v225
        %v272 = vpop.permute.xlu0 %271
        %275 = vset.pattern.permute.xlu0 0
        %276 = vperm.xlu0 %275, %v226
        %v277 = vpop.permute.xlu0 %276
        %v279 = vadd.f32 %v261, %v272
        %v280 = vadd.f32 %v262, %v272
        %v281 = vadd.f32 %v263, %v272
        %v282 = vadd.f32 %v264, %v272
        %v283 = vadd.f32 %v265, %v277
        %v284 = vadd.f32 %v266, %v277
        %v285 = vadd.f32 %v267, %v277
        %v286 = vadd.f32 %v268, %v277
        %v287 = vmax.f32 %v279, 0.0
        %v288 = vmax.f32 %v280, 0.0
        %v289 = vmax.f32 %v281, 0.0
        %v290 = vmax.f32 %v282, 0.0
        %v291 = vmax.f32 %v283, 0.0
        %v292 = vmax.f32 %v284, 0.0
        %v293 = vmax.f32 %v285, 0.0
        %v294 = vmax.f32 %v286, 0.0
        %296 = vset.pattern.permute.xlu0 0
        %297 = vperm.xlu0 %296, %v228
        %v298 = vpop.permute.xlu0 %297
        %vm300 = vcmask 130048
        %v302 = vsel %vm300, %v227, 0
        %304 = vmatprep.subr.mxu0 0.0
        %305 = vmatpush1.msra.mxu0 0.0
        %306 = vmatprep.subr.mxu0 0.0
        %307 = vmatpush1.msra.mxu0 0.0
        %308 = vmatprep.subr.mxu0 0.0
        %309 = vmatpush1.msra.mxu0 0.0
        %310 = vmatprep.subr.mxu0 0.0
        %311 = vmatpush1.msra.mxu0 0.0
        %312 = vmatprep.subr.mxu0 0.0
        %313 = vmatpush1.msra.mxu0 0.0
        %314 = vmatprep.subr.mxu0 0.0
        %315 = vmatpush1.msra.mxu0 0.0
        %316 = vmatprep.subr.mxu0 0.0
        %317 = vmatpush1.msra.mxu0 0.0
        %318 = vmatprep.subr.mxu0 0.0
        %319 = vmatpush1.msra.mxu0 0.0
        %320 = vmatprep.subr.mxu0 0.0
        %321 = vmatpush1.msra.mxu0 0.0
        %322 = vmatprep.subr.mxu0 0.0
        %323 = vmatpush1.msra.mxu0 0.0
        %324 = vmatprep.subr.mxu0 0.0
        %325 = vmatpush1.msra.mxu0 0.0
        %326 = vmatprep.subr.mxu0 0.0
        %327 = vmatpush1.msra.mxu0 0.0
        %328 = vmatprep.subr.mxu0 0.0
        %329 = vmatpush1.msra.mxu0 0.0
        %330 = vmatprep.subr.mxu0 0.0
        %331 = vmatpush1.msra.mxu0 0.0
        %332 = vmatprep.subr.mxu0 %v292
        %333 = vmatpush1.msra.mxu0 %v291
        %334 = vmatprep.subr.mxu0 %v288
        %335 = vmatpush1.msra.mxu0 %v287
        %336 = vmatprep.subr.mxu0 0.0
        %337 = vmatpush2.msra.mxu0 0.0
        %338 = vmatprep.subr.mxu0 0.0
        %339 = vmatpush2.msra.mxu0 0.0
        %340 = vmatprep.subr.mxu0 0.0
        %341 = vmatpush2.msra.mxu0 0.0
        %342 = vmatprep.subr.mxu0 0.0
        %343 = vmatpush2.msra.mxu0 0.0
        %344 = vmatprep.subr.mxu0 0.0
        %345 = vmatpush2.msra.mxu0 0.0
        %346 = vmatprep.subr.mxu0 0.0
        %347 = vmatpush2.msra.mxu0 0.0
        %348 = vmatprep.subr.mxu0 0.0
        %349 = vmatpush2.msra.mxu0 0.0
        %350 = vmatprep.subr.mxu0 0.0
        %351 = vmatpush2.msra.mxu0 0.0
        %352 = vmatprep.subr.mxu0 0.0
        %353 = vmatpush2.msra.mxu0 0.0
        %354 = vmatprep.subr.mxu0 0.0
        %355 = vmatpush2.msra.mxu0 0.0
        %356 = vmatprep.subr.mxu0 0.0
        %357 = vmatpush2.msra.mxu0 0.0
        %358 = vmatprep.subr.mxu0 0.0
        %359 = vmatpush2.msra.mxu0 0.0
        %360 = vmatprep.subr.mxu0 0.0
        %361 = vmatpush2.msra.mxu0 0.0
        %362 = vmatprep.subr.mxu0 0.0
        %363 = vmatpush2.msra.mxu0 0.0
        %364 = vmatprep.subr.mxu0 0.0
        %365 = vmatpush2.msra.mxu0 0.0
        %366 = vmatprep.subr.mxu0 0.0
        %367 = vmatpush2.msra.mxu0 0.0
        %368 = vmatprep.mubr.f32.mxu0 0.0
        %369 = vmatmul.mubr.f32.gmra.mxu0 %v302
        %v370 = vpop.f32.mrf.mxu0
        %v371 = vadd.f32 %v298, %v370
        %v372 = vpop.f32.mrf.mxu0
        %v373 = vadd.f32 %v298, %v372
        %374 = vdwg.mxu0
        %375 = vmatprep.subr.mxu0 0.0
        %376 = vmatpush1.msra.mxu0 0.0
        %377 = vmatprep.subr.mxu0 0.0
        %378 = vmatpush1.msra.mxu0 0.0
        %379 = vmatprep.subr.mxu0 0.0
        %380 = vmatpush1.msra.mxu0 0.0
        %381 = vmatprep.subr.mxu0 0.0
        %382 = vmatpush1.msra.mxu0 0.0
        %383 = vmatprep.subr.mxu0 0.0
        %384 = vmatpush1.msra.mxu0 0.0
        %385 = vmatprep.subr.mxu0 0.0
        %386 = vmatpush1.msra.mxu0 0.0
        %387 = vmatprep.subr.mxu0 0.0
        %388 = vmatpush1.msra.mxu0 0.0
        %389 = vmatprep.subr.mxu0 0.0
        %390 = vmatpush1.msra.mxu0 0.0
        %391 = vmatprep.subr.mxu0 0.0
        %392 = vmatpush1.msra.mxu0 0.0
        %393 = vmatprep.subr.mxu0 0.0
        %394 = vmatpush1.msra.mxu0 0.0
        %395 = vmatprep.subr.mxu0 0.0
        %396 = vmatpush1.msra.mxu0 0.0
        %397 = vmatprep.subr.mxu0 0.0
        %398 = vmatpush1.msra.mxu0 0.0
        %399 = vmatprep.subr.mxu0 0.0
        %400 = vmatpush1.msra.mxu0 0.0
        %401 = vmatprep.subr.mxu0 0.0
        %402 = vmatpush1.msra.mxu0 0.0
        %403 = vmatprep.subr.mxu0 %v294
        %404 = vmatpush1.msra.mxu0 %v293
        %405 = vmatprep.subr.mxu0 %v290
        %406 = vmatpush1.msra.mxu0 %v289
        %407 = vmatprep.subr.mxu0 0.0
        %408 = vmatpush2.msra.mxu0 0.0
        %409 = vmatprep.subr.mxu0 0.0
        %410 = vmatpush2.msra.mxu0 0.0
        %411 = vmatprep.subr.mxu0 0.0
        %412 = vmatpush2.msra.mxu0 0.0
        %413 = vmatprep.subr.mxu0 0.0
        %414 = vmatpush2.msra.mxu0 0.0
        %415 = vmatprep.subr.mxu0 0.0
        %416 = vmatpush2.msra.mxu0 0.0
        %417 = vmatprep.subr.mxu0 0.0
        %418 = vmatpush2.msra.mxu0 0.0
        %419 = vmatprep.subr.mxu0 0.0
        %420 = vmatpush2.msra.mxu0 0.0
        %421 = vmatprep.subr.mxu0 0.0
        %422 = vmatpush2.msra.mxu0 0.0
        %423 = vmatprep.subr.mxu0 0.0
        %424 = vmatpush2.msra.mxu0 0.0
        %425 = vmatprep.subr.mxu0 0.0
        %426 = vmatpush2.msra.mxu0 0.0
        %427 = vmatprep.subr.mxu0 0.0
        %428 = vmatpush2.msra.mxu0 0.0
        %429 = vmatprep.subr.mxu0 0.0
        %430 = vmatpush2.msra.mxu0 0.0
        %431 = vmatprep.subr.mxu0 0.0
        %432 = vmatpush2.msra.mxu0 0.0
        %433 = vmatprep.subr.mxu0 0.0
        %434 = vmatpush2.msra.mxu0 0.0
        %435 = vmatprep.subr.mxu0 0.0
        %436 = vmatpush2.msra.mxu0 0.0
        %437 = vmatprep.subr.mxu0 0.0
        %438 = vmatpush2.msra.mxu0 0.0
        %439 = vmatprep.mubr.f32.mxu0 0.0
        %440 = vmatmul.mubr.f32.gmra.mxu0 %v302
        %v441 = vpop.f32.mrf.mxu0
        %v442 = vadd.f32 %v298, %v441
        %v443 = vpop.f32.mrf.mxu0
        %v444 = vadd.f32 %v298, %v443
        %445 = vdwg.mxu0
        %vm446 = vcmask 1042432
        %v447 = vsel %vm446, %v371, -inf
        %v448 = vrot.slane %v447, 4
        %v449 = vmax.f32 %v447, %v448
        %v450 = vrot.slane %v449, 2
        %v451 = vmax.f32 %v449, %v450
        %v452 = vrot.slane %v451, 1
        %v453 = vmax.f32 %v451, %v452
        %v454 = vsel %vm446, %v373, -inf
        %v455 = vrot.slane %v454, 4
        %v456 = vmax.f32 %v454, %v455
        %v457 = vrot.slane %v456, 2
        %v458 = vmax.f32 %v456, %v457
        %v459 = vrot.slane %v458, 1
        %v460 = vmax.f32 %v458, %v459
        %v461 = vsel %vm446, %v442, -inf
        %v462 = vrot.slane %v461, 4
        %v463 = vmax.f32 %v461, %v462
        %v464 = vrot.slane %v463, 2
        %v465 = vmax.f32 %v463, %v464
        %v466 = vrot.slane %v465, 1
        %v467 = vmax.f32 %v465, %v466
        %v468 = vsel %vm446, %v444, -inf
        %v469 = vrot.slane %v468, 4
        %v470 = vmax.f32 %v468, %v469
        %v471 = vrot.slane %v470, 2
        %v472 = vmax.f32 %v470, %v471
        %v473 = vrot.slane %v472, 1
        %v474 = vmax.f32 %v472, %v473
        %v475 = vsub.f32 %v371, %v453
        %v476 = vsub.f32 %v373, %v460
        %v477 = vsub.f32 %v442, %v467
        %v478 = vsub.f32 %v444, %v474
        %v479 = vmul.f32 %v475, 1.442695
        %v480 = vpow.pop %v479
        %v481 = vmul.f32 %v476, 1.442695
        %v482 = vpow.pop %v481
        %v483 = vmul.f32 %v477, 1.442695
        %v484 = vpow.pop %v483
        %v485 = vmul.f32 %v478, 1.442695
        %v486 = vpow.pop %v485
        %v487 = vsel %vm446, %v480, 0.0
        %v488 = vrot.slane %v487, 4
        %v489 = vadd.f32 %v487, %v488
        %v490 = vrot.slane %v489, 2
        %v491 = vadd.f32 %v489, %v490
        %v492 = vrot.slane %v491, 1
        %v493 = vadd.f32 %v491, %v492
        %v494 = vsel %vm446, %v482, 0.0
        %v495 = vrot.slane %v494, 4
        %v496 = vadd.f32 %v494, %v495
        %v497 = vrot.slane %v496, 2
        %v498 = vadd.f32 %v496, %v497
        %v499 = vrot.slane %v498, 1
        %v500 = vadd.f32 %v498, %v499
        %v501 = vsel %vm446, %v484, 0.0
        %v502 = vrot.slane %v501, 4
        %v503 = vadd.f32 %v501, %v502
        %v504 = vrot.slane %v503, 2
        %v505 = vadd.f32 %v503, %v504
        %v506 = vrot.slane %v505, 1
        %v507 = vadd.f32 %v505, %v506
        %v508 = vsel %vm446, %v486, 0.0
        %v509 = vrot.slane %v508, 4
        %v510 = vadd.f32 %v508, %v509
        %v511 = vrot.slane %v510, 2
        %v512 = vadd.f32 %v510, %v511
        %v513 = vrot.slane %v512, 1
        %v514 = vadd.f32 %v512, %v513
        %v515 = vrcp.pop %v493
        %v516 = vrcp.pop %v500
        %v517 = vrcp.pop %v507
        %v518 = vrcp.pop %v514
        %v519 = vmul.f32 %v493, %v515
        %v520 = vmul.f32 %v500, %v516
        %v521 = vmul.f32 %v507, %v517
        %v522 = vmul.f32 %v514, %v518
        %v523 = vsub.f32 2.0, %v519
        %v524 = vsub.f32 2.0, %v520
        %v525 = vsub.f32 2.0, %v521
        %v526 = vsub.f32 2.0, %v522
        %v527 = vmul.f32 %v515, %v523
        %v528 = vmul.f32 %v516, %v524
        %v529 = vmul.f32 %v517, %v525
        %v530 = vmul.f32 %v518, %v526
        %v531 = vmul.f32 %v480, %v527
        %v532 = vmul.f32 %v482, %v528
        %v533 = vmul.f32 %v484, %v529
        %v534 = vmul.f32 %v486, %v530
        %v539 = vcombine.low %v531, %v532
        %v540 = vcombine.low %v533, %v534
        %543 = vst [vmem:[%s216] sm:$0x77] %v539
        %544 = vst [vmem:[%s216 + $0x8] sm:$0x77] %v540
        %s545 = sand.u32 %s137, 1
        %s546 = scalar_lea.sflag [#allocation3], %s545
        %s547 = sand.u32 %s137, 1
        %s548 = smul.addr %s547, 16
        %s549 = scalar_lea.vmem [#allocation2], %s548
        // Predicated region
        $region41: #{tpu_custom_call.1} parent=39 // pred_check
          %p550 = pneg %p147
        $region42: #{tpu_custom_call.1} parent=39 // pred_check_branch
          %552 = sbr.rel (%p550) target = $region44
        $region43: #{tpu_custom_call.1} parent=39 // pred_region
          %s553 = smul.u32 4, %s19
          %s555 = ssub.s32 256, 256
          %556 = vsyncadd %s546, %s555
          %s557 = smul.addr %s553, 64
          %s558 = scalar_lea.hbm %s5, %s557
          %s560 = sshll.u32 %s549, 4
          %s561 = int_to_ptr.vmem [resolvable:$true] %s560
          %563 = dma.vmem_to_hbm [thread:$0]  %s561, 256, %s558, %s546
        $region44: #{tpu_custom_call.1} parent=39 // pred_fallthru
          _
      $region40: #{tpu_custom_call.1} parent=5 // pred_fallthru
        _
      %p564 = scmp.le.s32.totalorder 2, %s14
      // Predicated region
      $region45: #{tpu_custom_call.1} parent=5 // pred_check
        %p565 = pneg %p564
      $region46: #{tpu_custom_call.1} parent=5 // pred_check_branch
        %567 = sbr.rel (%p565) target = $region48
      $region47: #{tpu_custom_call.1} parent=5 // pred_region
        %s568 = ssub.s32 %s14, 2
        // Predicated region
        $region49: #{tpu_custom_call.1} parent=47 // pred_check
          %p569 = pneg %p153
        $region50: #{tpu_custom_call.1} parent=47 // pred_check_branch
          %571 = sbr.rel (%p569) target = $region52
        $region51: #{tpu_custom_call.1} parent=47 // pred_region
          %s572 = sand.u32 %s138, 1
          %s573 = scalar_lea.sflag [#allocation3], %s572
          %s574 = sand.u32 %s138, 1
          %s575 = smul.addr %s574, 16
          %s576 = scalar_lea.vmem [#allocation2], %s575
          %577 = dma.done %s573, 256
        $region52: #{tpu_custom_call.1} parent=47 // pred_fallthru
          _
      $region48: #{tpu_custom_call.1} parent=5 // pred_fallthru
        _
    $region6: #{tpu_custom_call.1} parent=1 // loop_footer
      %s18 = sadd.s32 1, %s14
    $region7: #{tpu_custom_call.1} parent=1 // loop_footer_branch
      %13 = sbr.rel target = $region3
    $region8: #{tpu_custom_call.1} parent=1 // loop_exit
      _
    %578 = vsyncpa [#allocation3], 1
    %s579 = scalar_lea.sflag [#allocation3], 1
    %580 = vsyncpa %s579, 1

</llo_original>
